<compile_context>
chip_gen: v7x
topology: tpu7x:2x2x1
jax: 0.10.0
libtpu: 0.0.40
codegen_flags: <defaults>
</compile_context>

<pallas_src>
import functools

import jax
import jax.numpy as jnp
from jax import lax
from jax.experimental import pallas as pl
from jax.experimental.pallas import tpu as pltpu


_LANE = 128
_DEFAULT_MAX_TK = 16384
_MiB = 1024 * 1024


# ----------------------------------------------------------------------------
# Planning helpers
# ----------------------------------------------------------------------------
def _vmem_budget():
    """Generation-aware VMEM sizing (v5e/v6e: 128 MiB, v7x: 64 MiB per core)."""
    try:
        phys = int(pltpu.get_tpu_info().vmem_capacity_bytes)
    except Exception:                       # unknown generation / query failed
        phys = 64 * _MiB                    # conservative (v7x-sized) fallback
    budget = min(phys // 2, 96 * _MiB)      # working-set budget for the pipeline
    limit = min((phys * 3) // 4, 128 * _MiB)
    return budget, limit


def _pick_m_tile(M, budget):
    """Row-tile of the gram.

    Keep a single row block for small / mem-bound M (row tiling re-reads the
    feature stream once per block); for large (MXU-bound) M or when the
    resident (target + accumulator) footprint would blow VMEM, tile rows so the
    'parallel' grid axis has >= 2 blocks (uses both TensorCores on v7x).
    """
    def fits(tm):
        return 3 * tm * M * 4 <= budget // 2   # leave >= half for the K stream

    if M < 512 and fits(M):
        return M
    for tm in (512, 256, 128, 64, 32, 16, 8):
        if tm < M and M % tm == 0 and fits(tm):
            return tm
    if fits(M):
        return M
    raise ValueError(
        f"StyleLoss Pallas kernel: resident gram footprint for M={M} does not "
        f"fit the VMEM budget ({budget} bytes); need finer M tiling.")


def _pick_k_tile(M, K, tm, feat_bytes, budget, max_tk):
    """Largest lane-aligned K tile whose double-buffered stream fits the budget."""
    fixed = 3 * tm * M * 4                  # target block (2 bufs) + f32 accumulator
    avail = budget - fixed
    if avail < 2 * M * feat_bytes * _LANE:  # can't double-buffer even one lane tile
        raise ValueError(
            f"StyleLoss Pallas kernel: no VMEM left for the K stream "
            f"(M={M}, tm={tm}, budget={budget} bytes).")
    tk = avail // (2 * M * feat_bytes)      # 2x: BlockSpec double-buffering
    tk = min(tk, max_tk)
    if tk >= K:
        return K                            # full-dim block is always legal
    return (tk // _LANE) * _LANE            # partial blocks must be lane multiples


def _plan(x_nchw, max_tk, tm):
    a, b, c, d = x_nchw.shape
    M, K = a * b, c * d
    feats = x_nchw.reshape(M, K)            # metadata-only reshape, dtype unchanged
    budget, vmem_limit = _vmem_budget()
    if tm is None:
        tm = _pick_m_tile(M, budget)
    if M % tm != 0:
        raise ValueError(f"tm={tm} must divide M={M}")
    nm = M // tm
    tk = _pick_k_tile(M, K, tm, feats.dtype.itemsize, budget, max_tk)
    nk = int(pl.cdiv(K, tk))
    ragged = (K % tk) != 0
    return feats, M, K, tm, nm, tk, nk, ragged, vmem_limit


# ----------------------------------------------------------------------------
# Shared accumulation step: acc[rows_i, :] += F[rows_i, ktile] @ F[:, ktile].T
# ----------------------------------------------------------------------------
def _accumulate_gram(feat_ref, acc_ref, i, k, *, tm, nm, tk, k_cols, mask_tail):
    f_all = feat_ref[...]                               # (M, tk) streamed f32 tile
    if mask_tail:
        # Ragged final K tile: the out-of-range columns of the block hold
        # unspecified data -> zero them before the dot (avoids NaN/Inf leaks).
        col = lax.broadcasted_iota(jnp.int32, f_all.shape, 1) + k * tk
        f_all = jnp.where(col < k_cols, f_all, 0.0)
    if nm == 1:
        f_rows = f_all
    else:
        f_rows = feat_ref[pl.ds(i * tm, tm), :]         # (tm, tk) row slice (VMEM)
        if mask_tail:
            col_r = lax.broadcasted_iota(jnp.int32, f_rows.shape, 1) + k * tk
            f_rows = jnp.where(col_r < k_cols, f_rows, 0.0)
    # Contract dim 1 of BOTH operands (== F_rows @ F_all.T): no transpose of the
    # (M, tk) tile is materialized.  bf16 MXU feed, f32 accumulation.
    acc_ref[...] += lax.dot_general(
        f_rows.astype(jnp.bfloat16), f_all.astype(jnp.bfloat16),
        dimension_numbers=(((1,), (1,)), ((), ())),
        preferred_element_type=jnp.float32)


# ----------------------------------------------------------------------------
# Kernel 1: gram matrix  G = (F @ F.T) / (M*K), K-axis streamed, rows tiled.
# The resident (TM, M) output block doubles as the f32 accumulator.
# ----------------------------------------------------------------------------
def _gram_kernel(feat_ref, g_ref, *, inv_denom, tm, nm, tk, k_cols, ragged):
    i = pl.program_id(0)
    k = pl.program_id(1)
    nk = pl.num_programs(1)

    @pl.when(k == 0)
    def _init():
        g_ref[...] = jnp.zeros_like(g_ref)

    if ragged:
        @pl.when(k < nk - 1)
        def _body():
            _accumulate_gram(feat_ref, g_ref, i, k, tm=tm, nm=nm, tk=tk,
                             k_cols=k_cols, mask_tail=False)

        @pl.when(k == nk - 1)
        def _tail():
            _accumulate_gram(feat_ref, g_ref, i, k, tm=tm, nm=nm, tk=tk,
                             k_cols=k_cols, mask_tail=True)
    else:
        _accumulate_gram(feat_ref, g_ref, i, k, tm=tm, nm=nm, tk=tk,
                         k_cols=k_cols, mask_tail=False)

    @pl.when(k == nk - 1)
    def _finalize():
        g_ref[...] *= inv_denom


def gram_matrix_pallas(x_nchw, *, max_tk=_DEFAULT_MAX_TK, tm=None):
    feats, M, K, tm, nm, tk, nk, ragged, vmem_limit = _plan(x_nchw, max_tk, tm)
    kernel = functools.partial(
        _gram_kernel, inv_denom=1.0 / float(M * K),
        tm=tm, nm=nm, tk=tk, k_cols=K, ragged=ragged)
    return pl.pallas_call(
        kernel,
        out_shape=jax.ShapeDtypeStruct((M, M), jnp.float32),
        grid_spec=pltpu.PrefetchScalarGridSpec(
            num_scalar_prefetch=0,
            grid=(nm, nk),
            in_specs=[pl.BlockSpec((M, tk), lambda i, k: (0, k))],
            out_specs=pl.BlockSpec((tm, M), lambda i, k: (i, 0)),
        ),
        compiler_params=pltpu.CompilerParams(
            dimension_semantics=("parallel", "arbitrary"),
            vmem_limit_bytes=vmem_limit),
        cost_estimate=pl.CostEstimate(
            flops=2 * M * M * K,
            transcendentals=0,
            bytes_accessed=nm * M * K * feats.dtype.itemsize + M * M * 4),
    )(feats)


# ----------------------------------------------------------------------------
# Kernel 2 (forward hot path): fused gram + MSE against the target gram.
# Only per-row-block scalar partial losses leave the kernel; the gram row block
# lives in a VMEM scratch accumulator.
# ----------------------------------------------------------------------------
def _style_loss_kernel(feat_ref, target_ref, loss_ref, acc_ref, *,
                       inv_denom, inv_mm, tm, nm, tk, k_cols, ragged):
    i = pl.program_id(0)
    k = pl.program_id(1)
    nk = pl.num_programs(1)

    @pl.when(k == 0)
    def _init():
        acc_ref[...] = jnp.zeros_like(acc_ref)

    if ragged:
        @pl.when(k < nk - 1)
        def _body():
            _accumulate_gram(feat_ref, acc_ref, i, k, tm=tm, nm=nm, tk=tk,
                             k_cols=k_cols, mask_tail=False)

        @pl.when(k == nk - 1)
        def _tail():
            _accumulate_gram(feat_ref, acc_ref, i, k, tm=tm, nm=nm, tk=tk,
                             k_cols=k_cols, mask_tail=True)
    else:
        _accumulate_gram(feat_ref, acc_ref, i, k, tm=tm, nm=nm, tk=tk,
                         k_cols=k_cols, mask_tail=False)

    @pl.when(k == nk - 1)
    def _finalize():
        # TODO(synk): exploit gram symmetry (j >= i tiles, off-diagonal weight 2)
        # to cut MXU work ~2x when M is large and the kernel is MXU-bound.
        diff = acc_ref[...] * inv_denom - target_ref[...]
        loss_ref[0, 0, 0] = jnp.sum(diff * diff) * inv_mm


def style_loss_forward_pallas(x_nchw, target_gram, *, max_tk=_DEFAULT_MAX_TK,
                              tm=None):
    feats, M, K, tm, nm, tk, nk, ragged, vmem_limit = _plan(x_nchw, max_tk, tm)
    kernel = functools.partial(
        _style_loss_kernel,
        inv_denom=1.0 / float(M * K), inv_mm=1.0 / float(M * M),
        tm=tm, nm=nm, tk=tk, k_cols=K, ragged=ragged)
    loss_parts = pl.pallas_call(
        kernel,
        out_shape=jax.ShapeDtypeStruct((nm, 1, 1), jnp.float32),
        grid_spec=pltpu.PrefetchScalarGridSpec(
            num_scalar_prefetch=0,
            grid=(nm, nk),
            in_specs=[
                pl.BlockSpec((M, tk), lambda i, k: (0, k)),   # K-streamed features
                pl.BlockSpec((tm, M), lambda i, k: (i, 0)),   # target gram row block
            ],
            out_specs=pl.BlockSpec((1, 1, 1), lambda i, k: (i, 0, 0)),
            scratch_shapes=[pltpu.VMEM((tm, M), jnp.float32)],   # gram accumulator
        ),
        compiler_params=pltpu.CompilerParams(
            dimension_semantics=("parallel", "arbitrary"),
            vmem_limit_bytes=vmem_limit),
        cost_estimate=pl.CostEstimate(
            flops=2 * M * M * K,
            transcendentals=0,
            bytes_accessed=(nm * M * K * feats.dtype.itemsize
                            + M * M * 4 + nm * 4)),
    )(feats, target_gram.astype(jnp.float32))
    return jnp.sum(loss_parts)


# ----------------------------------------------------------------------------
# Module analogue (forward only)
# ----------------------------------------------------------------------------
class StyleLoss:
    def __init__(self, target_feature):
        # target gram computed once (detached constant) via the Pallas gram kernel
        self.target = gram_matrix_pallas(target_feature)
        self.loss = None

    def __call__(self, x):
        self.loss = style_loss_forward_pallas(x, self.target)
        return x  # forward passes input through unchanged


# ----------------------------------------------------------------------------
# Reference (pure JAX, f32) for correctness check
# ----------------------------------------------------------------------------
def _gram_ref(x):
    a, b, c, d = x.shape
    f = x.reshape(a * b, c * d).astype(jnp.float32)
    return (f @ f.T) / (a * b * c * d)


if __name__ == "__main__":
    key = jax.random.PRNGKey(0)
    k1, k2, k3, k4, k5, k6 = jax.random.split(key, 6)

    # --- test 1: batch=2, channels=4, spatial=16x16 (single K block) --------
    target_feature = jax.random.normal(k1, (2, 4, 16, 16), dtype=jnp.float32)
    x = jax.random.normal(k2, (2, 4, 16, 16), dtype=jnp.float32)

    module = StyleLoss(target_feature)
    out = module(x)
    jax.block_until_ready(out)
    loss = jax.block_until_ready(module.loss)

    t_ref = _gram_ref(target_feature)
    loss_ref = jnp.mean((_gram_ref(x) - t_ref) ** 2)

    assert out.shape == x.shape
    assert bool(jnp.all(out == x))
    # bf16 MXU feed (f32 accumulation) -> loosened tolerances vs f32 reference.
    assert jnp.allclose(module.target, t_ref, atol=1e-3, rtol=5e-2)
    assert jnp.allclose(loss, loss_ref, atol=1e-5, rtol=1e-1), (loss, loss_ref)

    # --- test 2: ragged K tiles (K=400, TK=128, in-kernel tail mask) --------
    tf2 = jax.random.normal(k3, (2, 4, 20, 20), dtype=jnp.float32)   # K = 400
    x2 = jax.random.normal(k4, (2, 4, 20, 20), dtype=jnp.float32)
    t2 = gram_matrix_pallas(tf2, max_tk=128)                 # 4 tiles, last ragged
    loss2 = style_loss_forward_pallas(x2, t2, max_tk=128)
    jax.block_until_ready(loss2)
    t2_ref = _gram_ref(tf2)
    loss2_ref = jnp.mean((_gram_ref(x2) - t2_ref) ** 2)
    assert jnp.allclose(t2, t2_ref, atol=1e-3, rtol=5e-2)
    assert jnp.allclose(loss2, loss2_ref, atol=1e-5, rtol=1e-1), (loss2, loss2_ref)

    # --- test 3: row-tiled parallel axis (M=128, TM=64) + ragged K ----------
    tf3 = jax.random.normal(k5, (2, 64, 20, 20), dtype=jnp.float32)  # M=128, K=400
    x3 = jax.random.normal(k6, (2, 64, 20, 20), dtype=jnp.float32)
    t3 = gram_matrix_pallas(tf3, max_tk=128, tm=64)
    loss3 = style_loss_forward_pallas(x3, t3, max_tk=128, tm=64)
    jax.block_until_ready(loss3)
    t3_ref = _gram_ref(tf3)
    loss3_ref = jnp.mean((_gram_ref(x3) - t3_ref) ** 2)
    assert jnp.allclose(t3, t3_ref, atol=1e-3, rtol=5e-2)
    assert jnp.allclose(loss3, loss3_ref, atol=1e-5, rtol=1e-1), (loss3, loss3_ref)

    print("KERNEL_OK")
</pallas_src>

<mosaic_0001>
module attributes {stable_mosaic.version = 11 : i64} {
  func.func @_gram_kernel(%arg0: i32, %arg1: i32, %arg2: memref<8x256xf32, #tpu.memory_space<vmem>>, %arg3: memref<8x8xf32, #tpu.memory_space<vmem>>) attributes {dimension_semantics = [#tpu.dimension_semantics<parallel>, #tpu.dimension_semantics<arbitrary>], iteration_bounds = array<i64: 1, 1>, scalar_prefetch = 0 : i64, scratch_operands = 0 : i64, tpu.core_type = #tpu.core_type<tc>, window_params = [{transform_indices = @transform_0, window_bounds = array<i64: 8, 256>}, {transform_indices = @transform_1, window_bounds = array<i64: 8, 8>}]} {
    %c0_i32 = arith.constant 0 : i32
    %0 = arith.cmpi eq, %arg1, %c0_i32 : i32
    %1 = arith.extui %0 : i1 to i32
    %c0_i32_0 = arith.constant 0 : i32
    %2 = arith.cmpi ne, %1, %c0_i32_0 : i32
    scf.if %2 {
      %cst_8 = arith.constant 0.000000e+00 : f32
      %13 = vector.broadcast %cst_8 : f32 to vector<8x8xf32>
      %c0_9 = arith.constant 0 : index
      %c0_10 = arith.constant 0 : index
      %14 = vector.load %arg3[%c0_9, %c0_10] : memref<8x8xf32, #tpu.memory_space<vmem>>, vector<8x8xf32>
      tpu.vector_store %arg3[%c0_9, %c0_10], %13 {strides = array<i32>} : memref<8x8xf32, #tpu.memory_space<vmem>>, vector<8x8xf32>,
    } else {
    }
    %c0 = arith.constant 0 : index
    %c0_1 = arith.constant 0 : index
    %3 = vector.load %arg2[%c0, %c0_1] : memref<8x256xf32, #tpu.memory_space<vmem>>, vector<8x256xf32>
    %c0_2 = arith.constant 0 : index
    %c0_3 = arith.constant 0 : index
    %4 = vector.load %arg3[%c0_2, %c0_3] : memref<8x8xf32, #tpu.memory_space<vmem>>, vector<8x8xf32>
    %5 = arith.truncf %3 : vector<8x256xf32> to vector<8x256xbf16>
    %6 = arith.truncf %3 : vector<8x256xf32> to vector<8x256xbf16>
    %cst = arith.constant dense<0.000000e+00> : vector<8x8xf32>
    %7 = tpu.matmul %5, %6, %cst {dimension_numbers = #tpu.dot_dimension_numbers<[1], [1], [0], [0], [0, 0, 1, 0], [], []>} : vector<8x256xbf16>, vector<8x256xbf16>, vector<8x8xf32> -> vector<8x8xf32>
    %8 = arith.addf %4, %7 : vector<8x8xf32>
    %c0_4 = arith.constant 0 : index
    %c0_5 = arith.constant 0 : index
    %9 = vector.load %arg3[%c0_4, %c0_5] : memref<8x8xf32, #tpu.memory_space<vmem>>, vector<8x8xf32>
    tpu.vector_store %arg3[%c0_4, %c0_5], %8 {strides = array<i32>} : memref<8x8xf32, #tpu.memory_space<vmem>>, vector<8x8xf32>,
    %c0_i32_6 = arith.constant 0 : i32
    %10 = arith.cmpi eq, %arg1, %c0_i32_6 : i32
    %11 = arith.extui %10 : i1 to i32
    %c0_i32_7 = arith.constant 0 : i32
    %12 = arith.cmpi ne, %11, %c0_i32_7 : i32
    scf.if %12 {
      %c0_8 = arith.constant 0 : index
      %c0_9 = arith.constant 0 : index
      %13 = vector.load %arg3[%c0_8, %c0_9] : memref<8x8xf32, #tpu.memory_space<vmem>>, vector<8x8xf32>
      %cst_10 = arith.constant 4.8828125E-4 : f32
      %14 = vector.broadcast %cst_10 : f32 to vector<8x8xf32>
      %15 = arith.mulf %13, %14 : vector<8x8xf32>
      %c0_11 = arith.constant 0 : index
      %c0_12 = arith.constant 0 : index
      %16 = vector.load %arg3[%c0_11, %c0_12] : memref<8x8xf32, #tpu.memory_space<vmem>>, vector<8x8xf32>
      tpu.vector_store %arg3[%c0_11, %c0_12], %15 {strides = array<i32>} : memref<8x8xf32, #tpu.memory_space<vmem>>, vector<8x8xf32>,
    } else {
    }
    return
  }
  func.func @transform_0(%arg0: i32, %arg1: i32) -> (i32, i32) {
    %c0_i32 = arith.constant 0 : i32
    %c0_i32_0 = arith.constant 0 : i32
    return %c0_i32, %arg1 : i32, i32
  }
  func.func @transform_1(%arg0: i32, %arg1: i32) -> (i32, i32) {
    %c0_i32 = arith.constant 0 : i32
    %c0_i32_0 = arith.constant 0 : i32
    return %arg0, %c0_i32 : i32, i32
  }
}

</mosaic_0001>

<llo_original>
// kernel: tpu_custom_call.1
$region0: #{tpu_custom_call.1}
  #allocation0 [shape = 'u32[]', space=smem, size = 0x4, offset = 0x4, fixed_abs, tag = 'smem constant byte address 0x4 - core index']
  #allocation1 [shape = 'u32[144,128]{1,0:T(1,128)}', space=vmem, size = 0x12000, scoped, tag = 'internal scratch']
  %s0 = inlined_call_operand.hbm [shape: f32[8,256], index: 0, kind: input, shape index: {}]
  %s1 = inlined_call_operand.hbm [shape: f32[8,8], index: 1, kind: output, shape index: {}]
  %s2 = sld [smem:[#allocation0]]
  $region26: #{tpu_custom_call.1} parent=0
    _
  %s4 = ssub.s32 1, %s2
  %s5 = scalar_select 0, %s4, %s2
  $region1: #{tpu_custom_call.1} parent=0
    #allocation2 [shape = 'u8[8192]{0}', space=vmem, size = 0x2000, scoped, tag = 'input window, operand 0, single buffered']
    #allocation3 [shape = 's32[1]{0}', space=sflag, size = 0x4, scoped, tag = 'scoped memory for tpu_custom_call.1']
    #allocation4 [shape = 's32[1]{0}', space=sflag, size = 0x4, scoped, tag = 'scoped memory for tpu_custom_call.1']
    #allocation5 [shape = 'u8[4096]{0}', space=vmem, size = 0x1000, scoped, tag = 'output window, operand 0, single buffered']
    %6 = vsyncpa [#allocation3], 0
    %7 = vsyncpa [#allocation4], 0
    // Predicated region
    $region2: #{tpu_custom_call.1} parent=1 // pred_check
      _
    $region3: #{tpu_custom_call.1} parent=1 // pred_check_branch
      %9 = sbr.rel (0) target = $region5
    $region4: #{tpu_custom_call.1} parent=1 // pred_region
      %s11 = ssub.s32 256, 256
      %12 = vsyncadd [#allocation3], %s11
      %s14 = sshll.u32 [#allocation2], 4
      %s15 = int_to_ptr.vmem [resolvable:$true] %s14
      %17 = dma.hbm_to_vmem [thread:$0]  %s0, 256, %s15, [#allocation3]
    $region5: #{tpu_custom_call.1} parent=1 // pred_fallthru
      _
    // Predicated region
    $region6: #{tpu_custom_call.1} parent=1 // pred_check
      _
    $region7: #{tpu_custom_call.1} parent=1 // pred_check_branch
      %19 = sbr.rel (0) target = $region9
    $region8: #{tpu_custom_call.1} parent=1 // pred_region
      %20 = dma.done [#allocation3], 256
    $region9: #{tpu_custom_call.1} parent=1 // pred_fallthru
      _
    %p22 = scmp.eq.s32.totalorder 0, 0
    // Predicated region
    $region10: #{tpu_custom_call.1} parent=1 // pred_check
      %p23 = pneg %p22
    $region11: #{tpu_custom_call.1} parent=1 // pred_check_branch
      %25 = sbr.rel (%p23) target = $region13
    $region12: #{tpu_custom_call.1} parent=1 // pred_region
      %vm26 = vcmask 64512
      %27 = vst.msk [vmem:[#allocation5] sm:$0xff] %vm26, 0.0
    $region13: #{tpu_custom_call.1} parent=1 // pred_fallthru
      _
    %v28 = vld [vmem:[#allocation2] sm:$0xff]
    %v29 = vld [vmem:[#allocation2 + $0x8] sm:$0xff]
    %v30 = vld [vmem:[#allocation5] sm:$0xff]
    %v31 = vpack.c.bf16 %v28, %v28
    %v32 = vpack.c.bf16 %v29, %v29
    %33 = vmatprep.subr.bf16.mxu0 %v32
    %34 = vmatpush1.bf16.xpose.msra.mxu0 %v31
    %35 = vmatprep.subr.bf16.mxu0 0
    %36 = vmatpush1.bf16.xpose.msra.mxu0 0
    %37 = vmatprep.subr.bf16.mxu0 0
    %38 = vmatpush1.bf16.xpose.msra.mxu0 0
    %39 = vmatprep.subr.bf16.mxu0 0
    %40 = vmatpush1.bf16.xpose.msra.mxu0 0
    %41 = vmatprep.subr.bf16.mxu0 0
    %42 = vmatpush1.bf16.xpose.msra.mxu0 0
    %43 = vmatprep.subr.bf16.mxu0 0
    %44 = vmatpush1.bf16.xpose.msra.mxu0 0
    %45 = vmatprep.subr.bf16.mxu0 0
    %46 = vmatpush1.bf16.xpose.msra.mxu0 0
    %47 = vmatprep.subr.bf16.mxu0 0
    %48 = vmatpush1.bf16.xpose.msra.mxu0 0
    %49 = vmatprep.subr.bf16.mxu0 0
    %50 = vmatpush1.bf16.xpose.msra.mxu0 0
    %51 = vmatprep.subr.bf16.mxu0 0
    %52 = vmatpush1.bf16.xpose.msra.mxu0 0
    %53 = vmatprep.subr.bf16.mxu0 0
    %54 = vmatpush1.bf16.xpose.msra.mxu0 0
    %55 = vmatprep.subr.bf16.mxu0 0
    %56 = vmatpush1.bf16.xpose.msra.mxu0 0
    %57 = vmatprep.subr.bf16.mxu0 0
    %58 = vmatpush1.bf16.xpose.msra.mxu0 0
    %59 = vmatprep.subr.bf16.mxu0 0
    %60 = vmatpush1.bf16.xpose.msra.mxu0 0
    %61 = vmatprep.subr.bf16.mxu0 0
    %62 = vmatpush1.bf16.xpose.msra.mxu0 0
    %63 = vmatprep.subr.bf16.mxu0 0
    %64 = vmatpush1.bf16.xpose.msra.mxu0 0
    %65 = vmatprep.mubr.bf16.mxu0 %v32
    %66 = vmatmul.mubr.bf16.gmra.mrb[0].mxu0 %v31
    %v67 = vpop.f32.mrb[0].mxu0
    %v68 = vadd.f32 0.0, %v67
    %v69 = vpop.f32.mrb[0].mxu0
    %v70 = vpop.f32.mrb[0].mxu0
    %v71 = vpop.f32.mrb[0].mxu0
    %72 = vdwg.mxu0
    %v73 = vadd.f32 %v30, %v68
    %vm74 = vcmask 64512
    %75 = vst.msk [vmem:[#allocation5] sm:$0xff] %vm74, %v73
    // Predicated region
    $region14: #{tpu_custom_call.1} parent=1 // pred_check
      %p76 = pneg %p22
    $region15: #{tpu_custom_call.1} parent=1 // pred_check_branch
      %78 = sbr.rel (%p76) target = $region17
    $region16: #{tpu_custom_call.1} parent=1 // pred_region
      %v79 = vld [vmem:[#allocation5] sm:$0xff]
      %v80 = vmul.f32 %v79, 0.00048828125
      %81 = vst.msk [vmem:[#allocation5] sm:$0xff] %vm74, %v80
    $region17: #{tpu_custom_call.1} parent=1 // pred_fallthru
      _
    // Predicated region
    $region18: #{tpu_custom_call.1} parent=1 // pred_check
      _
    $region19: #{tpu_custom_call.1} parent=1 // pred_check_branch
      %83 = sbr.rel (0) target = $region21
    $region20: #{tpu_custom_call.1} parent=1 // pred_region
      %s85 = ssub.s32 128, 128
      %86 = vsyncadd [#allocation4], %s85
      %s88 = sshll.u32 [#allocation5], 4
      %s89 = int_to_ptr.vmem [resolvable:$true] %s88
      %91 = dma.vmem_to_hbm [thread:$0]  %s89, 128, %s1, [#allocation4]
    $region21: #{tpu_custom_call.1} parent=1 // pred_fallthru
      _
    // Predicated region
    $region22: #{tpu_custom_call.1} parent=1 // pred_check
      _
    $region23: #{tpu_custom_call.1} parent=1 // pred_check_branch
      %93 = sbr.rel (0) target = $region25
    $region24: #{tpu_custom_call.1} parent=1 // pred_region
      %94 = dma.done [#allocation4], 128
    $region25: #{tpu_custom_call.1} parent=1 // pred_fallthru
      _
    %95 = vsyncpa [#allocation3], 1
    %96 = vsyncpa [#allocation4], 1

</llo_original>
